<compile_context>
chip_gen: v7x
topology: tpu7x:2x2x1
jax: 0.10.0
libtpu: 0.0.40
codegen_flags: <defaults>
</compile_context>

<pallas_src>
import math

import jax
import jax.numpy as jnp
from jax import lax
from jax.experimental import pallas as pl
from jax.experimental.pallas import tpu as pltpu


def _round_up(x, m):
    return ((x + m - 1) // m) * m


# ----------------------------------------------------------------------------
# Pallas kernel: fused (1,5) MeshConv matmul over one edge tile, resident
# (Cout_p, E_pad) output block, InstanceNorm(eps=1e-5, no affine) + ReLU
# finalize on the last edge tile.
# ----------------------------------------------------------------------------
def _make_meshconv_kernel(e_true, e_pad, tile_e, num_tiles):
    needs_mask = (e_true != e_pad)

    def kernel(g_ref, w_ref, mask_ref, o_ref):
        # g_ref   : (1, 5*Cin_p, tile_e)  bf16   symmetric GeMM operand tile
        # w_ref   : (Cout_p, 5*Cin_p)     bf16   MXU-ready conv weight
        # mask_ref: (1, E_pad)            f32    1.0 real edge, 0.0 pad lane
        # o_ref   : (1, Cout_p, E_pad)    f32    resident across the E-tile axis
        t = pl.program_id(1)

        # All five (1,5)-conv taps fused into one MXU matmul (K = 5*Cin_p).
        acc = jnp.dot(w_ref[...], g_ref[0], preferred_element_type=jnp.float32)

        if num_tiles == 1:
            o_ref[0, :, :] = acc
        else:
            start = pl.multiple_of(t * tile_e, 128)
            o_ref[0, :, pl.ds(start, tile_e)] = acc

        # Finalize once per (batch, layer): InstanceNorm2d(affine=False) + ReLU.
        @pl.when(t == num_tiles - 1)
        def _():
            x = o_ref[0]                                     # (Cout_p, E_pad) f32
            inv_e = 1.0 / e_true
            # Pad lanes of x are exactly zero (operand pad lanes are zero and
            # there is no bias), so plain lane sums / true E are exact means.
            mean = jnp.sum(x, axis=1, keepdims=True) * inv_e
            diff = x - mean
            if needs_mask:
                diff = diff * mask_ref[...]                  # zero pad lanes
            # Two-pass variance on the VMEM-resident activations (no
            # E[x^2] - mean^2 cancellation).
            var = jnp.sum(diff * diff, axis=1, keepdims=True) * inv_e
            y = jnp.maximum(diff * lax.rsqrt(var + 1e-5), 0.0)
            # Pad lanes stay zero -> layer output keeps the invariant the next
            # layer's gather relies on; the store is a full-lane vst.
            o_ref[0] = y.astype(o_ref.dtype)

    return kernel


def mesh_conv_in_relu(g, w2d, mask, e_true, tile_e):
    """g: (B, 5*Cin_p, E_pad) bf16, w2d: (Cout_p, 5*Cin_p) bf16,
       mask: (1, E_pad) f32  ->  (B, Cout_p, E_pad) f32."""
    B, k_dim, e_pad = g.shape
    cout_p = w2d.shape[0]
    num_tiles = e_pad // tile_e

    # Explicit VMEM budget: double-buffered input tile + weight + mask,
    # double-buffered resident output, plus headroom for finalize temporaries.
    in_tile = k_dim * tile_e * 2                      # bf16 operand tile
    out_blk = cout_p * e_pad * 4                      # f32 resident output
    work = 2 * in_tile + 2 * cout_p * k_dim * 2 + 2 * e_pad * 4 + 2 * out_blk
    work += in_tile + 4 * out_blk                     # kernel temporaries
    vmem_limit = int(min(64 << 20, max(32 << 20, 2 * work)))

    cost = pl.CostEstimate(
        flops=2 * B * cout_p * k_dim * e_pad,
        transcendentals=B * cout_p,
        bytes_accessed=B * (k_dim * e_pad * 2 + cout_p * e_pad * 4)
        + cout_p * k_dim * 2 + e_pad * 4,
    )

    return pl.pallas_call(
        _make_meshconv_kernel(e_true, e_pad, tile_e, num_tiles),
        out_shape=jax.ShapeDtypeStruct((B, cout_p, e_pad), jnp.float32),
        grid=(B, num_tiles),
        in_specs=[
            pl.BlockSpec((1, k_dim, tile_e), lambda b, t: (b, 0, t)),
            pl.BlockSpec((cout_p, k_dim), lambda b, t: (0, 0)),
            pl.BlockSpec((1, e_pad), lambda b, t: (0, 0)),
        ],
        out_specs=pl.BlockSpec((1, cout_p, e_pad), lambda b, t: (b, 0, 0)),
        compiler_params=pltpu.CompilerParams(
            dimension_semantics=("parallel", "arbitrary"),
            vmem_limit_bytes=vmem_limit,
        ),
        cost_estimate=cost,
    )(g, w2d, mask)


# ----------------------------------------------------------------------------
# XLA glue: the data-dependent 1-ring gather of MeshConv.create_GeMM, fused
# with the order-invariant symmetric combine -> kernel-ready GeMM operand.
# ----------------------------------------------------------------------------
def build_gemm_operand(fe_pad, gis, valid):
    """fe_pad: (B, Cin_p, E_pad) f32 with pad columns (and pad channels) zero.
       gis:    (B, 4, E_pad) int32 in-range neighbor ids (pad/missing -> 0).
       valid:  (B, 4, E_pad) bool, False for missing neighbors / pad lanes.
       Returns (B, 5*Cin_p, E_pad) bf16 with row blocks
       [f0; f1+f3; f2+f4; |f1-f3|; |f2-f4|]."""
    def one_tap(x, idx):                      # x: (Cin_p, E_pad), idx: (E_pad,)
        return jnp.take(x, idx, axis=1, mode="clip")

    # vmap over (batch, tap); no materialized 5x broadcast of fe_pad.
    nbr = jax.vmap(jax.vmap(one_tap, in_axes=(None, 0)), in_axes=(0, 0))(fe_pad, gis)
    nbr = jnp.where(valid[:, :, None, :], nbr, 0.0)          # (B, 4, Cin_p, E_pad)
    f1, f2, f3, f4 = nbr[:, 0], nbr[:, 1], nbr[:, 2], nbr[:, 3]
    g = jnp.concatenate(
        [fe_pad, f1 + f3, f2 + f4, jnp.abs(f1 - f3), jnp.abs(f2 - f4)], axis=1
    )
    return g.astype(jnp.bfloat16)


# ----------------------------------------------------------------------------
# MeshEncoder (DownConv stack, blocks=0, no pooling layers)
# ----------------------------------------------------------------------------
class MeshEncoderPallas:
    def __init__(self, pools, convs, key, blocks=0):
        assert blocks == 0, "blocks > 0 not exercised here"
        self.layers = []
        for i in range(len(convs) - 1):
            pool = pools[i + 1] if i + 1 < len(pools) else 0
            assert pool == 0  # TODO(synk): MeshPool is not implementable as a Pallas kernel
            cin, cout = convs[i], convs[i + 1]
            key, k1 = jax.random.split(key)
            # xavier_normal_ on Conv2d(cin, cout, (1,5)); bias = 0 (weight_init)
            fan_in, fan_out = cin * 5, cout * 5
            std = math.sqrt(2.0 / (fan_in + fan_out))
            w = jax.random.normal(k1, (cout, cin, 1, 5), jnp.float32) * std
            b = jnp.zeros((cout,), jnp.float32)
            # The kernel drops the conv bias: valid only because it is zero and
            # InstanceNorm2d(affine=False) would cancel a constant anyway.
            assert bool(jnp.all(b == 0.0))

            # Hoisted, MXU-ready bf16 weight: (Cout_p, 5*Cin_p), tap-major row
            # blocks w2d[:, k*Cin_p+ci] = W[:, ci, 0, k]; padded rows/cols zero.
            cin_p = _round_up(cin, 8)
            cout_p = _round_up(cout, 8)
            w2d = jnp.zeros((cout_p, 5 * cin_p), jnp.float32)
            for k in range(5):
                w2d = w2d.at[:cout, k * cin_p : k * cin_p + cin].set(w[:, :, 0, k])

            self.layers.append(
                dict(w=w, b=b, w2d=w2d.astype(jnp.bfloat16),
                     cin=cin, cin_p=cin_p, cout=cout, cout_p=cout_p)
            )

    def __call__(self, fe, gemm_edges):
        """fe: (B, C0, E), gemm_edges: (B, E, 4). Returns (fe_out, encoder_outs)."""
        B, c0, e_true = fe.shape
        assert c0 == self.layers[0]["cin"]

        # Edge-axis tiling: up to 512 lanes per input tile; pad E once.
        tile_e = min(_round_up(e_true, 128), 512)
        e_pad = _round_up(e_true, tile_e)
        mask = (jnp.arange(e_pad, dtype=jnp.int32) < e_true).astype(jnp.float32)[None, :]

        # Precompute gather indices once (shared by all layers).
        gi = jnp.transpose(gemm_edges.astype(jnp.int32), (0, 2, 1))      # (B,4,E)
        gi = jnp.pad(gi, ((0, 0), (0, 0), (0, e_pad - e_true)), constant_values=-1)
        valid = gi >= 0
        gis = jnp.where(valid, gi, 0)

        # Working tensor (B, Cin_p, E_pad) f32; pad columns / channels are zero.
        fe_x = jnp.pad(
            fe, ((0, 0), (0, self.layers[0]["cin_p"] - c0), (0, e_pad - e_true))
        )
        encoder_outs = []
        for layer in self.layers:
            g = build_gemm_operand(fe_x, gis, valid)          # (B, 5*Cin_p, E_pad) bf16
            fe_x = mesh_conv_in_relu(g, layer["w2d"], mask, e_true, tile_e)
            encoder_outs.append(None)  # no MeshPool -> before_pool is None

        fe_out = fe_x[:, : self.layers[-1]["cout"], :e_true]  # (B, C_last, E)
        return fe_out, encoder_outs


# ----------------------------------------------------------------------------
# Pure-JAX f32 reference of the DownConv stack (mirrors the PyTorch forward)
# ----------------------------------------------------------------------------
def _reference_layer(fe, gemm_edges, w, b):
    B, C, E = fe.shape
    edge_ids = jnp.broadcast_to(
        jnp.arange(E, dtype=jnp.int32)[None, :, None], (B, E, 1)
    )
    gi = jnp.concatenate([edge_ids, gemm_edges.astype(jnp.int32)], axis=2) + 1
    x_pad = jnp.concatenate([jnp.zeros((B, C, 1), fe.dtype), fe], axis=2)
    f = jax.vmap(lambda xp, g: xp[:, g])(x_pad, gi)                # (B,C,E,5)
    g5 = jnp.stack(
        [f[..., 0], f[..., 1] + f[..., 3], f[..., 2] + f[..., 4],
         jnp.abs(f[..., 1] - f[..., 3]), jnp.abs(f[..., 2] - f[..., 4])],
        axis=-1,
    )                                                              # (B,C,E,5)
    acc = jnp.einsum("bces,ocs->boe", g5, w[:, :, 0, :]) + b[None, :, None]
    mean = acc.mean(axis=2, keepdims=True)
    var = ((acc - mean) ** 2).mean(axis=2, keepdims=True)
    return jnp.maximum((acc - mean) * lax.rsqrt(var + 1e-5), 0.0)  # (B,Cout,E)


def reference_forward(fe, gemm_edges, layers):
    for layer in layers:
        fe = _reference_layer(fe, gemm_edges, layer["w"], layer["b"])
    return fe


if __name__ == "__main__":
    B, C0, E = 2, 4, 16
    convs = [C0, 16, 32]
    pools = [E]  # length 1 -> no MeshPool layers instantiated

    key = jax.random.PRNGKey(0)
    k_fe, k_g, k_w = jax.random.split(key, 3)

    fe = jax.random.normal(k_fe, (B, C0, E), jnp.float32)                # edge features
    gemm_edges = jax.random.randint(k_g, (B, E, 4), -1, E, jnp.int32)    # 1-ring ids (-1 = none)

    model = MeshEncoderPallas(pools, convs, k_w, blocks=0)
    fwd = jax.jit(lambda f, g: model(f, g))

    fe_out, encoder_outs = fwd(fe, gemm_edges)
    fe_out = jax.block_until_ready(fe_out)
    assert fe_out.shape == (B, convs[-1], E)
    assert len(encoder_outs) == len(convs) - 1
    assert all(o is None for o in encoder_outs)

    ref = reference_forward(fe, gemm_edges, model.layers)
    # bf16 GeMM operand / weights (f32 accumulation + f32 norm statistics):
    # tolerance relaxed vs. the pure-f32 reference accordingly.
    max_err = float(jnp.max(jnp.abs(ref - fe_out)))
    assert jnp.allclose(ref, fe_out, atol=7.5e-2, rtol=7.5e-2), max_err

    print("KERNEL_OK")
</pallas_src>

<mosaic_0001>
module attributes {stable_mosaic.version = 11 : i64} {
  func.func @kernel(%arg0: i32, %arg1: i32, %arg2: memref<1x40x128xbf16, #tpu.memory_space<vmem>>, %arg3: memref<16x40xbf16, #tpu.memory_space<vmem>>, %arg4: memref<1x128xf32, #tpu.memory_space<vmem>>, %arg5: memref<1x16x128xf32, #tpu.memory_space<vmem>>) attributes {dimension_semantics = [#tpu.dimension_semantics<parallel>, #tpu.dimension_semantics<arbitrary>], iteration_bounds = array<i64: 2, 1>, scalar_prefetch = 0 : i64, scratch_operands = 0 : i64, tpu.core_type = #tpu.core_type<tc>, window_params = [{transform_indices = @transform_0, window_bounds = array<i64: 1, 40, 128>}, {pipeline_mode = #tpu.pipeline_mode<synchronous>, transform_indices = @transform_1, window_bounds = array<i64: 16, 40>}, {pipeline_mode = #tpu.pipeline_mode<synchronous>, transform_indices = @transform_2, window_bounds = array<i64: 1, 128>}, {transform_indices = @transform_3, window_bounds = array<i64: 1, 16, 128>}]} {
    %c0 = arith.constant 0 : index
    %c0_0 = arith.constant 0 : index
    %0 = vector.load %arg3[%c0, %c0_0] : memref<16x40xbf16, #tpu.memory_space<vmem>>, vector<16x40xbf16>
    %c0_1 = arith.constant 0 : index
    %c0_2 = arith.constant 0 : index
    %c0_3 = arith.constant 0 : index
    %1 = vector.load %arg2[%c0_1, %c0_2, %c0_3] : memref<1x40x128xbf16, #tpu.memory_space<vmem>>, vector<1x40x128xbf16>
    %2 = vector.shape_cast %1 : vector<1x40x128xbf16> to vector<40x128xbf16>
    %cst = arith.constant dense<0.000000e+00> : vector<16x128xf32>
    %3 = tpu.matmul %0, %2, %cst {dimension_numbers = #tpu.dot_dimension_numbers<[1], [0], [0], [1], [0, 0, 1, 1], [], []>} : vector<16x40xbf16>, vector<40x128xbf16>, vector<16x128xf32> -> vector<16x128xf32>
    %c0_4 = arith.constant 0 : index
    %c0_5 = arith.constant 0 : index
    %c0_6 = arith.constant 0 : index
    %4 = vector.load %arg5[%c0_4, %c0_5, %c0_6] : memref<1x16x128xf32, #tpu.memory_space<vmem>>, vector<1x16x128xf32>
    %5 = vector.shape_cast %4 : vector<1x16x128xf32> to vector<16x128xf32>
    %6 = vector.shape_cast %3 : vector<16x128xf32> to vector<1x16x128xf32>
    tpu.vector_store %arg5[%c0_4, %c0_5, %c0_6], %6 {strides = array<i32>} : memref<1x16x128xf32, #tpu.memory_space<vmem>>, vector<1x16x128xf32>,
    %c0_i32 = arith.constant 0 : i32
    %7 = arith.cmpi eq, %arg1, %c0_i32 : i32
    %8 = arith.extui %7 : i1 to i32
    %c0_i32_7 = arith.constant 0 : i32
    %9 = arith.cmpi ne, %8, %c0_i32_7 : i32
    scf.if %9 {
      %c0_8 = arith.constant 0 : index
      %c0_9 = arith.constant 0 : index
      %c0_10 = arith.constant 0 : index
      %10 = vector.load %arg5[%c0_8, %c0_9, %c0_10] : memref<1x16x128xf32, #tpu.memory_space<vmem>>, vector<1x16x128xf32>
      %11 = vector.shape_cast %10 : vector<1x16x128xf32> to vector<16x128xf32>
      %cst_11 = arith.constant dense<0.000000e+00> : vector<16xf32>
      %12 = vector.multi_reduction <add>, %11, %cst_11 [1] : vector<16x128xf32> to vector<16xf32>
      %13 = vector.shape_cast %12 : vector<16xf32> to vector<16x1xf32>
      %cst_12 = arith.constant 6.250000e-02 : f32
      %14 = vector.broadcast %cst_12 : f32 to vector<16x1xf32>
      %15 = arith.mulf %13, %14 : vector<16x1xf32>
      %16 = vector.broadcast %15 : vector<16x1xf32> to vector<16x128xf32>
      %17 = arith.subf %11, %16 : vector<16x128xf32>
      %c0_13 = arith.constant 0 : index
      %c0_14 = arith.constant 0 : index
      %18 = vector.load %arg4[%c0_13, %c0_14] : memref<1x128xf32, #tpu.memory_space<vmem>>, vector<1x128xf32>
      %19 = vector.broadcast %18 : vector<1x128xf32> to vector<16x128xf32>
      %20 = arith.mulf %17, %19 : vector<16x128xf32>
      %21 = arith.mulf %20, %20 : vector<16x128xf32>
      %cst_15 = arith.constant dense<0.000000e+00> : vector<16xf32>
      %22 = vector.multi_reduction <add>, %21, %cst_15 [1] : vector<16x128xf32> to vector<16xf32>
      %23 = vector.shape_cast %22 : vector<16xf32> to vector<16x1xf32>
      %cst_16 = arith.constant 6.250000e-02 : f32
      %24 = vector.broadcast %cst_16 : f32 to vector<16x1xf32>
      %25 = arith.mulf %23, %24 : vector<16x1xf32>
      %cst_17 = arith.constant 9.99999974E-6 : f32
      %26 = vector.broadcast %cst_17 : f32 to vector<16x1xf32>
      %27 = arith.addf %25, %26 : vector<16x1xf32>
      %28 = math.rsqrt %27 : vector<16x1xf32>
      %29 = vector.broadcast %28 : vector<16x1xf32> to vector<16x128xf32>
      %30 = arith.mulf %20, %29 : vector<16x128xf32>
      %cst_18 = arith.constant 0.000000e+00 : f32
      %31 = vector.broadcast %cst_18 : f32 to vector<16x128xf32>
      %32 = arith.maximumf %30, %31 : vector<16x128xf32>
      %c0_19 = arith.constant 0 : index
      %c0_20 = arith.constant 0 : index
      %c0_21 = arith.constant 0 : index
      %33 = vector.load %arg5[%c0_19, %c0_20, %c0_21] : memref<1x16x128xf32, #tpu.memory_space<vmem>>, vector<1x16x128xf32>
      %34 = vector.shape_cast %33 : vector<1x16x128xf32> to vector<16x128xf32>
      %35 = vector.shape_cast %32 : vector<16x128xf32> to vector<1x16x128xf32>
      tpu.vector_store %arg5[%c0_19, %c0_20, %c0_21], %35 {strides = array<i32>} : memref<1x16x128xf32, #tpu.memory_space<vmem>>, vector<1x16x128xf32>,
    } else {
    }
    return
  }
  func.func @transform_0(%arg0: i32, %arg1: i32) -> (i32, i32, i32) {
    %c0_i32 = arith.constant 0 : i32
    %c0_i32_0 = arith.constant 0 : i32
    return %arg0, %c0_i32, %arg1 : i32, i32, i32
  }
  func.func @transform_1(%arg0: i32, %arg1: i32) -> (i32, i32) {
    %c0_i32 = arith.constant 0 : i32
    %c0_i32_0 = arith.constant 0 : i32
    %c0_i32_1 = arith.constant 0 : i32
    return %c0_i32, %c0_i32_0 : i32, i32
  }
  func.func @transform_2(%arg0: i32, %arg1: i32) -> (i32, i32) {
    %c0_i32 = arith.constant 0 : i32
    %c0_i32_0 = arith.constant 0 : i32
    %c0_i32_1 = arith.constant 0 : i32
    return %c0_i32, %c0_i32_0 : i32, i32
  }
  func.func @transform_3(%arg0: i32, %arg1: i32) -> (i32, i32, i32) {
    %c0_i32 = arith.constant 0 : i32
    %c0_i32_0 = arith.constant 0 : i32
    %c0_i32_1 = arith.constant 0 : i32
    return %arg0, %c0_i32, %c0_i32_0 : i32, i32, i32
  }
}

module attributes {stable_mosaic.version = 11 : i64} {
  func.func @kernel(%arg0: i32, %arg1: i32, %arg2: memref<1x80x128xbf16, #tpu.memory_space<vmem>>, %arg3: memref<32x80xbf16, #tpu.memory_space<vmem>>, %arg4: memref<1x128xf32, #tpu.memory_space<vmem>>, %arg5: memref<1x32x128xf32, #tpu.memory_space<vmem>>) attributes {dimension_semantics = [#tpu.dimension_semantics<parallel>, #tpu.dimension_semantics<arbitrary>], iteration_bounds = array<i64: 2, 1>, scalar_prefetch = 0 : i64, scratch_operands = 0 : i64, tpu.core_type = #tpu.core_type<tc>, window_params = [{transform_indices = @transform_0, window_bounds = array<i64: 1, 80, 128>}, {pipeline_mode = #tpu.pipeline_mode<synchronous>, transform_indices = @transform_1, window_bounds = array<i64: 32, 80>}, {pipeline_mode = #tpu.pipeline_mode<synchronous>, transform_indices = @transform_2, window_bounds = array<i64: 1, 128>}, {transform_indices = @transform_3, window_bounds = array<i64: 1, 32, 128>}]} {
    %c0 = arith.constant 0 : index
    %c0_0 = arith.constant 0 : index
    %0 = vector.load %arg3[%c0, %c0_0] : memref<32x80xbf16, #tpu.memory_space<vmem>>, vector<32x80xbf16>
    %c0_1 = arith.constant 0 : index
    %c0_2 = arith.constant 0 : index
    %c0_3 = arith.constant 0 : index
    %1 = vector.load %arg2[%c0_1, %c0_2, %c0_3] : memref<1x80x128xbf16, #tpu.memory_space<vmem>>, vector<1x80x128xbf16>
    %2 = vector.shape_cast %1 : vector<1x80x128xbf16> to vector<80x128xbf16>
    %cst = arith.constant dense<0.000000e+00> : vector<32x128xf32>
    %3 = tpu.matmul %0, %2, %cst {dimension_numbers = #tpu.dot_dimension_numbers<[1], [0], [0], [1], [0, 0, 1, 1], [], []>} : vector<32x80xbf16>, vector<80x128xbf16>, vector<32x128xf32> -> vector<32x128xf32>
    %c0_4 = arith.constant 0 : index
    %c0_5 = arith.constant 0 : index
    %c0_6 = arith.constant 0 : index
    %4 = vector.load %arg5[%c0_4, %c0_5, %c0_6] : memref<1x32x128xf32, #tpu.memory_space<vmem>>, vector<1x32x128xf32>
    %5 = vector.shape_cast %4 : vector<1x32x128xf32> to vector<32x128xf32>
    %6 = vector.shape_cast %3 : vector<32x128xf32> to vector<1x32x128xf32>
    tpu.vector_store %arg5[%c0_4, %c0_5, %c0_6], %6 {strides = array<i32>} : memref<1x32x128xf32, #tpu.memory_space<vmem>>, vector<1x32x128xf32>,
    %c0_i32 = arith.constant 0 : i32
    %7 = arith.cmpi eq, %arg1, %c0_i32 : i32
    %8 = arith.extui %7 : i1 to i32
    %c0_i32_7 = arith.constant 0 : i32
    %9 = arith.cmpi ne, %8, %c0_i32_7 : i32
    scf.if %9 {
      %c0_8 = arith.constant 0 : index
      %c0_9 = arith.constant 0 : index
      %c0_10 = arith.constant 0 : index
      %10 = vector.load %arg5[%c0_8, %c0_9, %c0_10] : memref<1x32x128xf32, #tpu.memory_space<vmem>>, vector<1x32x128xf32>
      %11 = vector.shape_cast %10 : vector<1x32x128xf32> to vector<32x128xf32>
      %cst_11 = arith.constant dense<0.000000e+00> : vector<32xf32>
      %12 = vector.multi_reduction <add>, %11, %cst_11 [1] : vector<32x128xf32> to vector<32xf32>
      %13 = vector.shape_cast %12 : vector<32xf32> to vector<32x1xf32>
      %cst_12 = arith.constant 6.250000e-02 : f32
      %14 = vector.broadcast %cst_12 : f32 to vector<32x1xf32>
      %15 = arith.mulf %13, %14 : vector<32x1xf32>
      %16 = vector.broadcast %15 : vector<32x1xf32> to vector<32x128xf32>
      %17 = arith.subf %11, %16 : vector<32x128xf32>
      %c0_13 = arith.constant 0 : index
      %c0_14 = arith.constant 0 : index
      %18 = vector.load %arg4[%c0_13, %c0_14] : memref<1x128xf32, #tpu.memory_space<vmem>>, vector<1x128xf32>
      %19 = vector.broadcast %18 : vector<1x128xf32> to vector<32x128xf32>
      %20 = arith.mulf %17, %19 : vector<32x128xf32>
      %21 = arith.mulf %20, %20 : vector<32x128xf32>
      %cst_15 = arith.constant dense<0.000000e+00> : vector<32xf32>
      %22 = vector.multi_reduction <add>, %21, %cst_15 [1] : vector<32x128xf32> to vector<32xf32>
      %23 = vector.shape_cast %22 : vector<32xf32> to vector<32x1xf32>
      %cst_16 = arith.constant 6.250000e-02 : f32
      %24 = vector.broadcast %cst_16 : f32 to vector<32x1xf32>
      %25 = arith.mulf %23, %24 : vector<32x1xf32>
      %cst_17 = arith.constant 9.99999974E-6 : f32
      %26 = vector.broadcast %cst_17 : f32 to vector<32x1xf32>
      %27 = arith.addf %25, %26 : vector<32x1xf32>
      %28 = math.rsqrt %27 : vector<32x1xf32>
      %29 = vector.broadcast %28 : vector<32x1xf32> to vector<32x128xf32>
      %30 = arith.mulf %20, %29 : vector<32x128xf32>
      %cst_18 = arith.constant 0.000000e+00 : f32
      %31 = vector.broadcast %cst_18 : f32 to vector<32x128xf32>
      %32 = arith.maximumf %30, %31 : vector<32x128xf32>
      %c0_19 = arith.constant 0 : index
      %c0_20 = arith.constant 0 : index
      %c0_21 = arith.constant 0 : index
      %33 = vector.load %arg5[%c0_19, %c0_20, %c0_21] : memref<1x32x128xf32, #tpu.memory_space<vmem>>, vector<1x32x128xf32>
      %34 = vector.shape_cast %33 : vector<1x32x128xf32> to vector<32x128xf32>
      %35 = vector.shape_cast %32 : vector<32x128xf32> to vector<1x32x128xf32>
      tpu.vector_store %arg5[%c0_19, %c0_20, %c0_21], %35 {strides = array<i32>} : memref<1x32x128xf32, #tpu.memory_space<vmem>>, vector<1x32x128xf32>,
    } else {
    }
    return
  }
  func.func @transform_0(%arg0: i32, %arg1: i32) -> (i32, i32, i32) {
    %c0_i32 = arith.constant 0 : i32
    %c0_i32_0 = arith.constant 0 : i32
    return %arg0, %c0_i32, %arg1 : i32, i32, i32
  }
  func.func @transform_1(%arg0: i32, %arg1: i32) -> (i32, i32) {
    %c0_i32 = arith.constant 0 : i32
    %c0_i32_0 = arith.constant 0 : i32
    %c0_i32_1 = arith.constant 0 : i32
    return %c0_i32, %c0_i32_0 : i32, i32
  }
  func.func @transform_2(%arg0: i32, %arg1: i32) -> (i32, i32) {
    %c0_i32 = arith.constant 0 : i32
    %c0_i32_0 = arith.constant 0 : i32
    %c0_i32_1 = arith.constant 0 : i32
    return %c0_i32, %c0_i32_0 : i32, i32
  }
  func.func @transform_3(%arg0: i32, %arg1: i32) -> (i32, i32, i32) {
    %c0_i32 = arith.constant 0 : i32
    %c0_i32_0 = arith.constant 0 : i32
    %c0_i32_1 = arith.constant 0 : i32
    return %arg0, %c0_i32, %c0_i32_0 : i32, i32, i32
  }
}

</mosaic_0001>

<llo_original>
// kernel: _lambda_.2
$region0: #{_lambda_.2}
  #allocation0 [shape = 'u32[]', space=smem, size = 0x4, offset = 0x4, fixed_abs, tag = 'smem constant byte address 0x4 - core index']
  #allocation1 [shape = 'u32[144,128]{1,0:T(1,128)}', space=vmem, size = 0x12000, scoped, tag = 'internal scratch']
  %s0 = inlined_call_operand.vmem [shape: bf16[2,40,128], index: 0, kind: input, shape index: {}]
  %s1 = inlined_call_operand.vmem [shape: bf16[16,40], index: 1, kind: input, shape index: {}]
  %s2 = inlined_call_operand.vmem [shape: f32[1,128], index: 2, kind: input, shape index: {}]
  %s3 = inlined_call_operand.vmem [shape: f32[2,16,128], index: 3, kind: output, shape index: {}]
  %s4 = sld [smem:[#allocation0]]
  $region49: #{_lambda_.2} parent=0
    _
  %s6 = ssub.s32 1, %s4
  %s7 = scalar_select 0, %s6, %s4
  loop: start=0, step=1, limit=4
  $region2: #{_lambda_.2} parent=0 // loop_pre_header
    _
  $region3: #{_lambda_.2} parent=0 // loop_header
    %s9 = sphi 0, %s13
    %p10 = scmp.ge.s32.totalorder %s9, 4
    %s16 = sphi 0, %s28
    %s17 = sphi 0, %s24
    %s18 = sphi 0, %s16
    %s19 = sphi 0, %s17
    %s20 = sphi 0, %s18
    %s21 = sphi 0, %s19
    %s33 = sphi 0, %s35
    %s36 = sphi 0, %s33
    %s37 = sphi 0, %s36
    %s53 = sphi 0, %s37
    %s57 = sphi 0, %s57
    %s59 = sphi 0, %s57
    %s60 = sphi 0, %s59
    %s74 = sphi 0, %s60
    %s78 = sphi 0, %s78
    %s80 = sphi 0, %s78
    %s81 = sphi 0, %s80
    %s95 = sphi 0, %s81
    %s101 = sphi 0, %s103
    %s104 = sphi 0, %s101
    %s105 = sphi 0, %s104
    %s121 = sphi 0, %s105
  $region4: #{_lambda_.2} parent=0 // loop_header_branch
    %12 = sbr.rel (%p10) target = $region8
  $region5: #{_lambda_.2} parent=0 // loop_body
    %s14 = ssub.s32 %s9, 1
    %s15 = ssub.s32 %s9, 2
    %s22 = sadd.s32 1, %s17
    %p23 = scmp.ge.s32.totalorder %s22, 1
    %s24 = scalar_select %p23, 0, %s22
    %s25 = sadd.s32 1, %s16
    %s26 = scalar_select %p23, %s25, %s16
    %p27 = scmp.ge.s32.totalorder %s26, 2
    %s28 = scalar_select %p27, 0, %s26
    %s29 = ssub.s32 %s16, %s28
    %s30 = ssub.s32 %s17, %s24
    %s31 = sor.u32 %s29, %s30
    %p32 = scmp.eq.s32.totalorder %s31, 0
    %s34 = sadd.s32 %s33, 1
    %s35 = scalar_select %p32, %s33, %s34
    %p38 = pneg %p32
    %p39 = scmp.eq.s32.totalorder %s9, 1
    %p40 = por %p38, %p39
    %p41 = scmp.ne.s32.totalorder %s33, %s36
    %p42 = scmp.eq.s32.totalorder %s9, 0
    %p43 = por %p41, %p42
    %p44 = scmp.ne.s32.totalorder %s33, %s36
    %p45 = scmp.eq.s32.totalorder %s14, 1
    %p46 = por %p44, %p45
    %p47 = scmp.ne.s32.totalorder %s36, %s37
    %p48 = scmp.eq.s32.totalorder %s14, 0
    %p49 = por %p47, %p48
    %p50 = scmp.ne.s32.totalorder %s36, %s37
    %p51 = scmp.eq.s32.totalorder %s15, 1
    %p52 = por %p50, %p51
    %p54 = scmp.ne.s32.totalorder %s37, %s53
    %p55 = scmp.eq.s32.totalorder %s15, 0
    %p56 = por %p54, %p55
    %s58 = sadd.s32 %s57, 1
    %p61 = scmp.eq.s32.totalorder %s9, 1
    %p62 = scmp.ne.s32.totalorder %s57, %s59
    %p63 = scmp.eq.s32.totalorder %s9, 0
    %p64 = por %p62, %p63
    %p65 = scmp.ne.s32.totalorder %s57, %s59
    %p66 = scmp.eq.s32.totalorder %s14, 1
    %p67 = por %p65, %p66
    %p68 = scmp.ne.s32.totalorder %s59, %s60
    %p69 = scmp.eq.s32.totalorder %s14, 0
    %p70 = por %p68, %p69
    %p71 = scmp.ne.s32.totalorder %s59, %s60
    %p72 = scmp.eq.s32.totalorder %s15, 1
    %p73 = por %p71, %p72
    %p75 = scmp.ne.s32.totalorder %s60, %s74
    %p76 = scmp.eq.s32.totalorder %s15, 0
    %p77 = por %p75, %p76
    %s79 = sadd.s32 %s78, 1
    %p82 = scmp.eq.s32.totalorder %s9, 1
    %p83 = scmp.ne.s32.totalorder %s78, %s80
    %p84 = scmp.eq.s32.totalorder %s9, 0
    %p85 = por %p83, %p84
    %p86 = scmp.ne.s32.totalorder %s78, %s80
    %p87 = scmp.eq.s32.totalorder %s14, 1
    %p88 = por %p86, %p87
    %p89 = scmp.ne.s32.totalorder %s80, %s81
    %p90 = scmp.eq.s32.totalorder %s14, 0
    %p91 = por %p89, %p90
    %p92 = scmp.ne.s32.totalorder %s80, %s81
    %p93 = scmp.eq.s32.totalorder %s15, 1
    %p94 = por %p92, %p93
    %p96 = scmp.ne.s32.totalorder %s81, %s95
    %p97 = scmp.eq.s32.totalorder %s15, 0
    %p98 = por %p96, %p97
    %s99 = ssub.s32 %s16, %s28
    %p100 = scmp.eq.s32.totalorder %s99, 0
    %s102 = sadd.s32 %s101, 1
    %s103 = scalar_select %p100, %s101, %s102
    %p106 = pneg %p100
    %p107 = scmp.eq.s32.totalorder %s9, 1
    %p108 = por %p106, %p107
    %p109 = scmp.ne.s32.totalorder %s101, %s104
    %p110 = scmp.eq.s32.totalorder %s9, 0
    %p111 = por %p109, %p110
    %p112 = scmp.ne.s32.totalorder %s101, %s104
    %p113 = scmp.eq.s32.totalorder %s14, 1
    %p114 = por %p112, %p113
    %p115 = scmp.ne.s32.totalorder %s104, %s105
    %p116 = scmp.eq.s32.totalorder %s14, 0
    %p117 = por %p115, %p116
    %p118 = scmp.ne.s32.totalorder %s104, %s105
    %p119 = scmp.eq.s32.totalorder %s15, 1
    %p120 = por %p118, %p119
    %p122 = scmp.ne.s32.totalorder %s105, %s121
    %p123 = scmp.eq.s32.totalorder %s15, 0
    %p124 = por %p122, %p123
    %p125 = scmp.le.s32.totalorder 1, %s9
    %p126 = scmp.lt.s32.totalorder %s9, 3
    %p127 = pnand %p125, %p126
    %p128 = pneg %p127
    // Predicated region
    $region9: #{_lambda_.2} parent=5 // pred_check
      _
    $region10: #{_lambda_.2} parent=5 // pred_check_branch
      %130 = sbr.rel (%p127) target = $region12
    $region11: #{_lambda_.2} parent=5 // pred_region
      %s131 = ssub.s32 %s9, 1
      // Predicated region
      $region13: #{_lambda_.2} parent=11 // pred_check
        %p132 = pneg %p70
      $region14: #{_lambda_.2} parent=11 // pred_check_branch
        %134 = sbr.rel (%p132) target = $region16
      $region15: #{_lambda_.2} parent=11 // pred_region
        _
      $region16: #{_lambda_.2} parent=11 // pred_fallthru
        _
      // Predicated region
      $region17: #{_lambda_.2} parent=11 // pred_check
        %p135 = pneg %p91
      $region18: #{_lambda_.2} parent=11 // pred_check_branch
        %137 = sbr.rel (%p135) target = $region20
      $region19: #{_lambda_.2} parent=11 // pred_region
        _
      $region20: #{_lambda_.2} parent=11 // pred_fallthru
        _
    $region12: #{_lambda_.2} parent=5 // pred_fallthru
      _
    %p138 = scmp.lt.s32.totalorder %s9, 2
    // Predicated region
    $region21: #{_lambda_.2} parent=5 // pred_check
      %p139 = pneg %p138
    $region22: #{_lambda_.2} parent=5 // pred_check_branch
      %141 = sbr.rel (%p139) target = $region24
    $region23: #{_lambda_.2} parent=5 // pred_region
      // Predicated region
      $region25: #{_lambda_.2} parent=23 // pred_check
        %p142 = pneg %p43
      $region26: #{_lambda_.2} parent=23 // pred_check_branch
        %144 = sbr.rel (%p142) target = $region28
      $region27: #{_lambda_.2} parent=23 // pred_region
        %p145 = scmp.lt.s32.totalorder %s16, 1
        %s146 = scalar_select %p145, %s16, 1
        %p147 = scmp.lt.s32.totalorder %s17, 0
        %s148 = scalar_select %p147, %s17, 0
        %s149 = smul.addr %s146, 5
        %s150 = sadd.s32 %s148, %s149
        %s151 = smul.addr %s150, 4
        %s152 = scalar_lea.vmem %s0, %s151
      $region28: #{_lambda_.2} parent=23 // pred_fallthru
        _
    $region24: #{_lambda_.2} parent=5 // pred_fallthru
      _
    %p153 = scmp.le.s32.totalorder 1, %s9
    %p154 = scmp.lt.s32.totalorder %s9, 3
    %p155 = pnand %p153, %p154
    %p156 = pneg %p155
    // Predicated region
    $region29: #{_lambda_.2} parent=5 // pred_check
      _
    $region30: #{_lambda_.2} parent=5 // pred_check_branch
      %158 = sbr.rel (%p155) target = $region32
    $region31: #{_lambda_.2} parent=5 // pred_region
      %s159 = ssub.s32 %s9, 1
      %p160 = scmp.lt.s32.totalorder %s18, 1
      %s161 = scalar_select %p160, %s18, 1
      %p162 = scmp.lt.s32.totalorder %s19, 0
      %s163 = scalar_select %p162, %s19, 0
      %s164 = smul.addr %s161, 5
      %s165 = sadd.s32 %s163, %s164
      %s166 = smul.addr %s165, 4
      %s167 = scalar_lea.vmem %s0, %s166
      %p168 = pneg %p49
      %p169 = pneg %p46
      %p170 = pneg %p70
      %p171 = pneg %p67
      %p172 = pneg %p91
      %p173 = pneg %p88
      %p174 = pneg %p117
      %p175 = pneg %p114
      %p176 = scmp.lt.s32.totalorder %s18, 1
      %s177 = scalar_select %p176, %s18, 1
      %s178 = smul.addr %s177, 2
      %s179 = smul.addr %s178, 8
      %s180 = scalar_lea.vmem %s3, %s179
      %p181 = scmp.lt.s32.totalorder %s18, 1
      %s182 = scalar_select %p181, %s18, 1
      %p183 = scmp.lt.s32.totalorder %s19, 0
      %s184 = scalar_select %p183, %s19, 0
      %s185 = smul.addr %s182, 5
      %s186 = sadd.s32 %s184, %s185
      %s187 = smul.addr %s186, 4
      %s188 = scalar_lea.vmem %s0, %s187
      %p189 = scmp.lt.s32.totalorder %s18, 1
      %s190 = scalar_select %p189, %s18, 1
      %s191 = smul.addr %s190, 2
      %s192 = smul.addr %s191, 8
      %s193 = scalar_lea.vmem %s3, %s192
      %v195 = vld [vmem:[%s1] sm:$0xf]
      %v196 = vld [vmem:[%s1 + $0x4] sm:$0xf]
      %v197 = vld [vmem:[%s188] sm:$0xf]
      %v198 = vld [vmem:[%s188 + $0x4] sm:$0xf]
      %v199 = vld [vmem:[%s188 + $0x8] sm:$0xf]
      %v200 = vld [vmem:[%s188 + $0xc] sm:$0xf]
      %v201 = vld [vmem:[%s188 + $0x10] sm:$0xf]
      %v204 = vunpack.c.l.b16 %v195
      %v205 = vunpack.c.l.b16 %v196
      %v206 = vpack.c.b16 %v205, %v204
      %v212 = vunpack.c.l.b16 %v197
      %v213 = vunpack.c.l.b16 %v198
      %v214 = vunpack.c.l.b16 %v199
      %v215 = vunpack.c.l.b16 %v200
      %v216 = vunpack.c.l.b16 %v201
      %v217 = vpack.c.b16 %v213, %v212
      %v218 = vpack.c.b16 %v215, %v214
      %v219 = vpack.c.b16 %v216, %v216
      %vm222 = vcmask 326656
      %v224 = vsel %vm222, %v206, 0
      %vm226 = vcmask 1043456
      %v228 = vsel %vm226, %v219, 0
      %230 = vmatprep.subr.bf16.mxu0 0
      %231 = vmatpush1.bf16.msra.mxu0 %v217
      %232 = vmatprep.subr.bf16.mxu0 0
      %233 = vmatpush1.bf16.msra.mxu0 %v218
      %234 = vmatprep.subr.bf16.mxu0 0
      %235 = vmatpush1.bf16.msra.mxu0 %v228
      %236 = vmatprep.subr.bf16.mxu0 0
      %237 = vmatpush1.bf16.msra.mxu0 0
      %238 = vmatprep.subr.bf16.mxu0 0
      %239 = vmatpush1.bf16.msra.mxu0 0
      %240 = vmatprep.subr.bf16.mxu0 0
      %241 = vmatpush1.bf16.msra.mxu0 0
      %242 = vmatprep.subr.bf16.mxu0 0
      %243 = vmatpush1.bf16.msra.mxu0 0
      %244 = vmatprep.subr.bf16.mxu0 0
      %245 = vmatpush1.bf16.msra.mxu0 0
      %246 = vmatprep.subr.bf16.mxu0 0
      %247 = vmatpush1.bf16.msra.mxu0 0
      %248 = vmatprep.subr.bf16.mxu0 0
      %249 = vmatpush1.bf16.msra.mxu0 0
      %250 = vmatprep.subr.bf16.mxu0 0
      %251 = vmatpush1.bf16.msra.mxu0 0
      %252 = vmatprep.subr.bf16.mxu0 0
      %253 = vmatpush1.bf16.msra.mxu0 0
      %254 = vmatprep.subr.bf16.mxu0 0
      %255 = vmatpush1.bf16.msra.mxu0 0
      %256 = vmatprep.subr.bf16.mxu0 0
      %257 = vmatpush1.bf16.msra.mxu0 0
      %258 = vmatprep.subr.bf16.mxu0 0
      %259 = vmatpush1.bf16.msra.mxu0 0
      %260 = vmatprep.subr.bf16.mxu0 0
      %261 = vmatpush1.bf16.msra.mxu0 0
      %262 = vmatprep.mubr.bf16.mxu0 0
      %263 = vmatmul.mubr.bf16.gmra.mrb[0].mxu0 %v224
      %v264 = vpop.f32.mrb[0].mxu0
      %v265 = vadd.f32 0.0, %v264
      %v266 = vpop.f32.mrb[0].mxu0
      %v267 = vpop.f32.mrb[0].mxu0
      %v268 = vadd.f32 0.0, %v267
      %v269 = vpop.f32.mrb[0].mxu0
      %270 = vdwg.mxu0
      %271 = vst [vmem:[%s193] sm:$0xff] %v265
      %272 = vst [vmem:[%s193 + $0x8] sm:$0xff] %v268
      %p273 = scmp.eq.s32.totalorder %s19, 0
      // Predicated region
      $region33: #{_lambda_.2} parent=31 // pred_check
        %p274 = pneg %p273
      $region34: #{_lambda_.2} parent=31 // pred_check_branch
        %276 = sbr.rel (%p274) target = $region36
      $region35: #{_lambda_.2} parent=31 // pred_region
        %v277 = vld [vmem:[%s193] sm:$0xff]
        %v278 = vld [vmem:[%s193 + $0x8] sm:$0xff]
        %279 = vadd.xlane.f32.xlu0 %v277
        %v280 = vpop.xlane.xlu0 %279
        %281 = vadd.xlane.f32.xlu0 %v278
        %v282 = vpop.xlane.xlu0 %281
        %v283 = vmul.f32 %v280, 0.0625
        %v284 = vmul.f32 %v282, 0.0625
        %v285 = vsub.f32 %v277, %v283
        %v286 = vsub.f32 %v278, %v284
        %v287 = vld [vmem:[%s2] sm:$0x1]
        %v289 = vlaneseq
        %v290 = vshrl.u32 %v289, 7
        %v291 = vsub.s32 0, %v290
        %v292 = vrot.slane %v287, %v291
        %v294 = vmul.f32 %v285, %v292
        %v295 = vmul.f32 %v286, %v292
        %v296 = vmul.f32 %v294, %v294
        %v297 = vmul.f32 %v295, %v295
        %298 = vadd.xlane.f32.xlu0 %v296
        %v299 = vpop.xlane.xlu0 %298
        %300 = vadd.xlane.f32.xlu0 %v297
        %v301 = vpop.xlane.xlu0 %300
        %v302 = vmul.f32 %v299, 0.0625
        %v303 = vmul.f32 %v301, 0.0625
        %v304 = vadd.f32 %v302, 1e-05
        %v305 = vadd.f32 %v303, 1e-05
        %v306 = vrsqrt.pop %v304
        %v307 = vrsqrt.pop %v305
        %v308 = vmul.f32 %v294, %v306
        %v309 = vmul.f32 %v295, %v307
        %v310 = vmax.f32 %v308, 0.0
        %v311 = vmax.f32 %v309, 0.0
        %312 = vst [vmem:[%s193] sm:$0xff] %v310
        %313 = vst [vmem:[%s193 + $0x8] sm:$0xff] %v311
      $region36: #{_lambda_.2} parent=31 // pred_fallthru
        _
      %p314 = scmp.lt.s32.totalorder %s18, 1
      %s315 = scalar_select %p314, %s18, 1
      %s316 = smul.addr %s315, 2
      %s317 = smul.addr %s316, 8
      %s318 = scalar_lea.vmem %s3, %s317
      // Predicated region
      $region37: #{_lambda_.2} parent=31 // pred_check
        %p319 = pneg %p114
      $region38: #{_lambda_.2} parent=31 // pred_check_branch
        %321 = sbr.rel (%p319) target = $region40
      $region39: #{_lambda_.2} parent=31 // pred_region
        _
      $region40: #{_lambda_.2} parent=31 // pred_fallthru
        _
    $region32: #{_lambda_.2} parent=5 // pred_fallthru
      _
    %p322 = scmp.le.s32.totalorder 2, %s9
    // Predicated region
    $region41: #{_lambda_.2} parent=5 // pred_check
      %p323 = pneg %p322
    $region42: #{_lambda_.2} parent=5 // pred_check_branch
      %325 = sbr.rel (%p323) target = $region44
    $region43: #{_lambda_.2} parent=5 // pred_region
      %s326 = ssub.s32 %s9, 2
      // Predicated region
      $region45: #{_lambda_.2} parent=43 // pred_check
        %p327 = pneg %p120
      $region46: #{_lambda_.2} parent=43 // pred_check_branch
        %329 = sbr.rel (%p327) target = $region48
      $region47: #{_lambda_.2} parent=43 // pred_region
        %p330 = scmp.lt.s32.totalorder %s20, 1
        %s331 = scalar_select %p330, %s20, 1
        %s332 = smul.addr %s331, 2
        %s333 = smul.addr %s332, 8
        %s334 = scalar_lea.vmem %s3, %s333
      $region48: #{_lambda_.2} parent=43 // pred_fallthru
        _
    $region44: #{_lambda_.2} parent=5 // pred_fallthru
      _
  $region6: #{_lambda_.2} parent=0 // loop_footer
    %s13 = sadd.s32 1, %s9
  $region7: #{_lambda_.2} parent=0 // loop_footer_branch
    %8 = sbr.rel target = $region3
  $region8: #{_lambda_.2} parent=0 // loop_exit
    _

// kernel: _lambda_.3
$region0: #{_lambda_.3}
  #allocation0 [shape = 'u32[]', space=smem, size = 0x4, offset = 0x4, fixed_abs, tag = 'smem constant byte address 0x4 - core index']
  #allocation1 [shape = 'u32[144,128]{1,0:T(1,128)}', space=vmem, size = 0x12000, scoped, tag = 'internal scratch']
  %s0 = inlined_call_operand.vmem [shape: bf16[2,80,128], index: 0, kind: input, shape index: {}]
  %s1 = inlined_call_operand.vmem [shape: bf16[32,80], index: 1, kind: input, shape index: {}]
  %s2 = inlined_call_operand.vmem [shape: f32[1,128], index: 2, kind: input, shape index: {}]
  %s3 = inlined_call_operand.vmem [shape: f32[2,32,128], index: 3, kind: output, shape index: {}]
  %s4 = sld [smem:[#allocation0]]
  $region49: #{_lambda_.3} parent=0
    _
  %s6 = ssub.s32 1, %s4
  %s7 = scalar_select 0, %s6, %s4
  loop: start=0, step=1, limit=4
  $region2: #{_lambda_.3} parent=0 // loop_pre_header
    _
  $region3: #{_lambda_.3} parent=0 // loop_header
    %s9 = sphi 0, %s13
    %p10 = scmp.ge.s32.totalorder %s9, 4
    %s16 = sphi 0, %s28
    %s17 = sphi 0, %s24
    %s18 = sphi 0, %s16
    %s19 = sphi 0, %s17
    %s20 = sphi 0, %s18
    %s21 = sphi 0, %s19
    %s33 = sphi 0, %s35
    %s36 = sphi 0, %s33
    %s37 = sphi 0, %s36
    %s53 = sphi 0, %s37
    %s57 = sphi 0, %s57
    %s59 = sphi 0, %s57
    %s60 = sphi 0, %s59
    %s74 = sphi 0, %s60
    %s78 = sphi 0, %s78
    %s80 = sphi 0, %s78
    %s81 = sphi 0, %s80
    %s95 = sphi 0, %s81
    %s101 = sphi 0, %s103
    %s104 = sphi 0, %s101
    %s105 = sphi 0, %s104
    %s121 = sphi 0, %s105
  $region4: #{_lambda_.3} parent=0 // loop_header_branch
    %12 = sbr.rel (%p10) target = $region8
  $region5: #{_lambda_.3} parent=0 // loop_body
    %s14 = ssub.s32 %s9, 1
    %s15 = ssub.s32 %s9, 2
    %s22 = sadd.s32 1, %s17
    %p23 = scmp.ge.s32.totalorder %s22, 1
    %s24 = scalar_select %p23, 0, %s22
    %s25 = sadd.s32 1, %s16
    %s26 = scalar_select %p23, %s25, %s16
    %p27 = scmp.ge.s32.totalorder %s26, 2
    %s28 = scalar_select %p27, 0, %s26
    %s29 = ssub.s32 %s16, %s28
    %s30 = ssub.s32 %s17, %s24
    %s31 = sor.u32 %s29, %s30
    %p32 = scmp.eq.s32.totalorder %s31, 0
    %s34 = sadd.s32 %s33, 1
    %s35 = scalar_select %p32, %s33, %s34
    %p38 = pneg %p32
    %p39 = scmp.eq.s32.totalorder %s9, 1
    %p40 = por %p38, %p39
    %p41 = scmp.ne.s32.totalorder %s33, %s36
    %p42 = scmp.eq.s32.totalorder %s9, 0
    %p43 = por %p41, %p42
    %p44 = scmp.ne.s32.totalorder %s33, %s36
    %p45 = scmp.eq.s32.totalorder %s14, 1
    %p46 = por %p44, %p45
    %p47 = scmp.ne.s32.totalorder %s36, %s37
    %p48 = scmp.eq.s32.totalorder %s14, 0
    %p49 = por %p47, %p48
    %p50 = scmp.ne.s32.totalorder %s36, %s37
    %p51 = scmp.eq.s32.totalorder %s15, 1
    %p52 = por %p50, %p51
    %p54 = scmp.ne.s32.totalorder %s37, %s53
    %p55 = scmp.eq.s32.totalorder %s15, 0
    %p56 = por %p54, %p55
    %s58 = sadd.s32 %s57, 1
    %p61 = scmp.eq.s32.totalorder %s9, 1
    %p62 = scmp.ne.s32.totalorder %s57, %s59
    %p63 = scmp.eq.s32.totalorder %s9, 0
    %p64 = por %p62, %p63
    %p65 = scmp.ne.s32.totalorder %s57, %s59
    %p66 = scmp.eq.s32.totalorder %s14, 1
    %p67 = por %p65, %p66
    %p68 = scmp.ne.s32.totalorder %s59, %s60
    %p69 = scmp.eq.s32.totalorder %s14, 0
    %p70 = por %p68, %p69
    %p71 = scmp.ne.s32.totalorder %s59, %s60
    %p72 = scmp.eq.s32.totalorder %s15, 1
    %p73 = por %p71, %p72
    %p75 = scmp.ne.s32.totalorder %s60, %s74
    %p76 = scmp.eq.s32.totalorder %s15, 0
    %p77 = por %p75, %p76
    %s79 = sadd.s32 %s78, 1
    %p82 = scmp.eq.s32.totalorder %s9, 1
    %p83 = scmp.ne.s32.totalorder %s78, %s80
    %p84 = scmp.eq.s32.totalorder %s9, 0
    %p85 = por %p83, %p84
    %p86 = scmp.ne.s32.totalorder %s78, %s80
    %p87 = scmp.eq.s32.totalorder %s14, 1
    %p88 = por %p86, %p87
    %p89 = scmp.ne.s32.totalorder %s80, %s81
    %p90 = scmp.eq.s32.totalorder %s14, 0
    %p91 = por %p89, %p90
    %p92 = scmp.ne.s32.totalorder %s80, %s81
    %p93 = scmp.eq.s32.totalorder %s15, 1
    %p94 = por %p92, %p93
    %p96 = scmp.ne.s32.totalorder %s81, %s95
    %p97 = scmp.eq.s32.totalorder %s15, 0
    %p98 = por %p96, %p97
    %s99 = ssub.s32 %s16, %s28
    %p100 = scmp.eq.s32.totalorder %s99, 0
    %s102 = sadd.s32 %s101, 1
    %s103 = scalar_select %p100, %s101, %s102
    %p106 = pneg %p100
    %p107 = scmp.eq.s32.totalorder %s9, 1
    %p108 = por %p106, %p107
    %p109 = scmp.ne.s32.totalorder %s101, %s104
    %p110 = scmp.eq.s32.totalorder %s9, 0
    %p111 = por %p109, %p110
    %p112 = scmp.ne.s32.totalorder %s101, %s104
    %p113 = scmp.eq.s32.totalorder %s14, 1
    %p114 = por %p112, %p113
    %p115 = scmp.ne.s32.totalorder %s104, %s105
    %p116 = scmp.eq.s32.totalorder %s14, 0
    %p117 = por %p115, %p116
    %p118 = scmp.ne.s32.totalorder %s104, %s105
    %p119 = scmp.eq.s32.totalorder %s15, 1
    %p120 = por %p118, %p119
    %p122 = scmp.ne.s32.totalorder %s105, %s121
    %p123 = scmp.eq.s32.totalorder %s15, 0
    %p124 = por %p122, %p123
    %p125 = scmp.le.s32.totalorder 1, %s9
    %p126 = scmp.lt.s32.totalorder %s9, 3
    %p127 = pnand %p125, %p126
    %p128 = pneg %p127
    // Predicated region
    $region9: #{_lambda_.3} parent=5 // pred_check
      _
    $region10: #{_lambda_.3} parent=5 // pred_check_branch
      %130 = sbr.rel (%p127) target = $region12
    $region11: #{_lambda_.3} parent=5 // pred_region
      %s131 = ssub.s32 %s9, 1
      // Predicated region
      $region13: #{_lambda_.3} parent=11 // pred_check
        %p132 = pneg %p70
      $region14: #{_lambda_.3} parent=11 // pred_check_branch
        %134 = sbr.rel (%p132) target = $region16
      $region15: #{_lambda_.3} parent=11 // pred_region
        _
      $region16: #{_lambda_.3} parent=11 // pred_fallthru
        _
      // Predicated region
      $region17: #{_lambda_.3} parent=11 // pred_check
        %p135 = pneg %p91
      $region18: #{_lambda_.3} parent=11 // pred_check_branch
        %137 = sbr.rel (%p135) target = $region20
      $region19: #{_lambda_.3} parent=11 // pred_region
        _
      $region20: #{_lambda_.3} parent=11 // pred_fallthru
        _
    $region12: #{_lambda_.3} parent=5 // pred_fallthru
      _
    %p138 = scmp.lt.s32.totalorder %s9, 2
    // Predicated region
    $region21: #{_lambda_.3} parent=5 // pred_check
      %p139 = pneg %p138
    $region22: #{_lambda_.3} parent=5 // pred_check_branch
      %141 = sbr.rel (%p139) target = $region24
    $region23: #{_lambda_.3} parent=5 // pred_region
      // Predicated region
      $region25: #{_lambda_.3} parent=23 // pred_check
        %p142 = pneg %p43
      $region26: #{_lambda_.3} parent=23 // pred_check_branch
        %144 = sbr.rel (%p142) target = $region28
      $region27: #{_lambda_.3} parent=23 // pred_region
        %p145 = scmp.lt.s32.totalorder %s16, 1
        %s146 = scalar_select %p145, %s16, 1
        %p147 = scmp.lt.s32.totalorder %s17, 0
        %s148 = scalar_select %p147, %s17, 0
        %s149 = smul.addr %s146, 10
        %s150 = sadd.s32 %s148, %s149
        %s151 = smul.addr %s150, 4
        %s152 = scalar_lea.vmem %s0, %s151
      $region28: #{_lambda_.3} parent=23 // pred_fallthru
        _
    $region24: #{_lambda_.3} parent=5 // pred_fallthru
      _
    %p153 = scmp.le.s32.totalorder 1, %s9
    %p154 = scmp.lt.s32.totalorder %s9, 3
    %p155 = pnand %p153, %p154
    %p156 = pneg %p155
    // Predicated region
    $region29: #{_lambda_.3} parent=5 // pred_check
      _
    $region30: #{_lambda_.3} parent=5 // pred_check_branch
      %158 = sbr.rel (%p155) target = $region32
    $region31: #{_lambda_.3} parent=5 // pred_region
      %s159 = ssub.s32 %s9, 1
      %p160 = scmp.lt.s32.totalorder %s18, 1
      %s161 = scalar_select %p160, %s18, 1
      %p162 = scmp.lt.s32.totalorder %s19, 0
      %s163 = scalar_select %p162, %s19, 0
      %s164 = smul.addr %s161, 10
      %s165 = sadd.s32 %s163, %s164
      %s166 = smul.addr %s165, 4
      %s167 = scalar_lea.vmem %s0, %s166
      %p168 = pneg %p49
      %p169 = pneg %p46
      %p170 = pneg %p70
      %p171 = pneg %p67
      %p172 = pneg %p91
      %p173 = pneg %p88
      %p174 = pneg %p117
      %p175 = pneg %p114
      %p176 = scmp.lt.s32.totalorder %s18, 1
      %s177 = scalar_select %p176, %s18, 1
      %s178 = smul.addr %s177, 4
      %s179 = smul.addr %s178, 8
      %s180 = scalar_lea.vmem %s3, %s179
      %p181 = scmp.lt.s32.totalorder %s18, 1
      %s182 = scalar_select %p181, %s18, 1
      %p183 = scmp.lt.s32.totalorder %s19, 0
      %s184 = scalar_select %p183, %s19, 0
      %s185 = smul.addr %s182, 10
      %s186 = sadd.s32 %s184, %s185
      %s187 = smul.addr %s186, 4
      %s188 = scalar_lea.vmem %s0, %s187
      %p189 = scmp.lt.s32.totalorder %s18, 1
      %s190 = scalar_select %p189, %s18, 1
      %s191 = smul.addr %s190, 4
      %s192 = smul.addr %s191, 8
      %s193 = scalar_lea.vmem %s3, %s192
      %v195 = vld [vmem:[%s1] sm:$0xf]
      %v196 = vld [vmem:[%s1 + $0x4] sm:$0xf]
      %v197 = vld [vmem:[%s1 + $0x8] sm:$0xf]
      %v198 = vld [vmem:[%s1 + $0xc] sm:$0xf]
      %v199 = vld [vmem:[%s188] sm:$0xf]
      %v200 = vld [vmem:[%s188 + $0x4] sm:$0xf]
      %v201 = vld [vmem:[%s188 + $0x8] sm:$0xf]
      %v202 = vld [vmem:[%s188 + $0xc] sm:$0xf]
      %v203 = vld [vmem:[%s188 + $0x10] sm:$0xf]
      %v204 = vld [vmem:[%s188 + $0x14] sm:$0xf]
      %v205 = vld [vmem:[%s188 + $0x18] sm:$0xf]
      %v206 = vld [vmem:[%s188 + $0x1c] sm:$0xf]
      %v207 = vld [vmem:[%s188 + $0x20] sm:$0xf]
      %v208 = vld [vmem:[%s188 + $0x24] sm:$0xf]
      %v213 = vunpack.c.l.b16 %v195
      %v214 = vunpack.c.l.b16 %v196
      %v215 = vunpack.c.l.b16 %v197
      %v216 = vunpack.c.l.b16 %v198
      %v217 = vpack.c.b16 %v214, %v213
      %v218 = vpack.c.b16 %v216, %v215
      %v229 = vunpack.c.l.b16 %v199
      %v230 = vunpack.c.l.b16 %v200
      %v231 = vunpack.c.l.b16 %v201
      %v232 = vunpack.c.l.b16 %v202
      %v233 = vunpack.c.l.b16 %v203
      %v234 = vunpack.c.l.b16 %v204
      %v235 = vunpack.c.l.b16 %v205
      %v236 = vunpack.c.l.b16 %v206
      %v237 = vunpack.c.l.b16 %v207
      %v238 = vunpack.c.l.b16 %v208
      %v239 = vpack.c.b16 %v230, %v229
      %v240 = vpack.c.b16 %v232, %v231
      %v241 = vpack.c.b16 %v234, %v233
      %v242 = vpack.c.b16 %v236, %v235
      %v243 = vpack.c.b16 %v238, %v237
      %vm249 = vcmask 654336
      %v251 = vsel %vm249, %v217, 0
      %v254 = vsel %vm249, %v218, 0
      %256 = vmatprep.subr.bf16.mxu0 0
      %257 = vmatpush1.bf16.msra.mxu0 %v239
      %258 = vmatprep.subr.bf16.mxu0 0
      %259 = vmatpush1.bf16.msra.mxu0 %v240
      %260 = vmatprep.subr.bf16.mxu0 0
      %261 = vmatpush1.bf16.msra.mxu0 %v241
      %262 = vmatprep.subr.bf16.mxu0 0
      %263 = vmatpush1.bf16.msra.mxu0 %v242
      %264 = vmatprep.subr.bf16.mxu0 0
      %265 = vmatpush1.bf16.msra.mxu0 %v243
      %266 = vmatprep.subr.bf16.mxu0 0
      %267 = vmatpush1.bf16.msra.mxu0 0
      %268 = vmatprep.subr.bf16.mxu0 0
      %269 = vmatpush1.bf16.msra.mxu0 0
      %270 = vmatprep.subr.bf16.mxu0 0
      %271 = vmatpush1.bf16.msra.mxu0 0
      %272 = vmatprep.subr.bf16.mxu0 0
      %273 = vmatpush1.bf16.msra.mxu0 0
      %274 = vmatprep.subr.bf16.mxu0 0
      %275 = vmatpush1.bf16.msra.mxu0 0
      %276 = vmatprep.subr.bf16.mxu0 0
      %277 = vmatpush1.bf16.msra.mxu0 0
      %278 = vmatprep.subr.bf16.mxu0 0
      %279 = vmatpush1.bf16.msra.mxu0 0
      %280 = vmatprep.subr.bf16.mxu0 0
      %281 = vmatpush1.bf16.msra.mxu0 0
      %282 = vmatprep.subr.bf16.mxu0 0
      %283 = vmatpush1.bf16.msra.mxu0 0
      %284 = vmatprep.subr.bf16.mxu0 0
      %285 = vmatpush1.bf16.msra.mxu0 0
      %286 = vmatprep.subr.bf16.mxu0 0
      %287 = vmatpush1.bf16.msra.mxu0 0
      %288 = vmatprep.mubr.bf16.mxu0 0
      %289 = vmatmul.mubr.bf16.gmra.mrb[0].mxu0 %v251
      %v290 = vpop.f32.mrb[0].mxu0
      %v291 = vadd.f32 0.0, %v290
      %v292 = vpop.f32.mrb[0].mxu0
      %v293 = vpop.f32.mrb[0].mxu0
      %v294 = vadd.f32 0.0, %v293
      %v295 = vpop.f32.mrb[0].mxu0
      %296 = vmatprep.mubr.bf16.mxu0 0
      %297 = vmatmul.mubr.bf16.gmra.mrb[0].mxu0 %v254
      %v298 = vpop.f32.mrb[0].mxu0
      %v299 = vadd.f32 0.0, %v298
      %v300 = vpop.f32.mrb[0].mxu0
      %v301 = vpop.f32.mrb[0].mxu0
      %v302 = vadd.f32 0.0, %v301
      %v303 = vpop.f32.mrb[0].mxu0
      %304 = vdwg.mxu0
      %305 = vst [vmem:[%s193] sm:$0xff] %v291
      %306 = vst [vmem:[%s193 + $0x8] sm:$0xff] %v294
      %307 = vst [vmem:[%s193 + $0x10] sm:$0xff] %v299
      %308 = vst [vmem:[%s193 + $0x18] sm:$0xff] %v302
      %p309 = scmp.eq.s32.totalorder %s19, 0
      // Predicated region
      $region33: #{_lambda_.3} parent=31 // pred_check
        %p310 = pneg %p309
      $region34: #{_lambda_.3} parent=31 // pred_check_branch
        %312 = sbr.rel (%p310) target = $region36
      $region35: #{_lambda_.3} parent=31 // pred_region
        %v313 = vld [vmem:[%s193] sm:$0xff]
        %v314 = vld [vmem:[%s193 + $0x8] sm:$0xff]
        %v315 = vld [vmem:[%s193 + $0x10] sm:$0xff]
        %v316 = vld [vmem:[%s193 + $0x18] sm:$0xff]
        %317 = vadd.xlane.f32.xlu0 %v313
        %v318 = vpop.xlane.xlu0 %317
        %319 = vadd.xlane.f32.xlu0 %v314
        %v320 = vpop.xlane.xlu0 %319
        %321 = vadd.xlane.f32.xlu0 %v315
        %v322 = vpop.xlane.xlu0 %321
        %323 = vadd.xlane.f32.xlu0 %v316
        %v324 = vpop.xlane.xlu0 %323
        %v325 = vmul.f32 %v318, 0.0625
        %v326 = vmul.f32 %v320, 0.0625
        %v327 = vmul.f32 %v322, 0.0625
        %v328 = vmul.f32 %v324, 0.0625
        %v329 = vsub.f32 %v313, %v325
        %v330 = vsub.f32 %v314, %v326
        %v331 = vsub.f32 %v315, %v327
        %v332 = vsub.f32 %v316, %v328
        %v333 = vld [vmem:[%s2] sm:$0x1]
        %v335 = vlaneseq
        %v336 = vshrl.u32 %v335, 7
        %v337 = vsub.s32 0, %v336
        %v338 = vrot.slane %v333, %v337
        %v340 = vmul.f32 %v329, %v338
        %v341 = vmul.f32 %v330, %v338
        %v342 = vmul.f32 %v331, %v338
        %v343 = vmul.f32 %v332, %v338
        %v344 = vmul.f32 %v340, %v340
        %v345 = vmul.f32 %v341, %v341
        %v346 = vmul.f32 %v342, %v342
        %v347 = vmul.f32 %v343, %v343
        %348 = vadd.xlane.f32.xlu0 %v344
        %v349 = vpop.xlane.xlu0 %348
        %350 = vadd.xlane.f32.xlu0 %v345
        %v351 = vpop.xlane.xlu0 %350
        %352 = vadd.xlane.f32.xlu0 %v346
        %v353 = vpop.xlane.xlu0 %352
        %354 = vadd.xlane.f32.xlu0 %v347
        %v355 = vpop.xlane.xlu0 %354
        %v356 = vmul.f32 %v349, 0.0625
        %v357 = vmul.f32 %v351, 0.0625
        %v358 = vmul.f32 %v353, 0.0625
        %v359 = vmul.f32 %v355, 0.0625
        %v360 = vadd.f32 %v356, 1e-05
        %v361 = vadd.f32 %v357, 1e-05
        %v362 = vadd.f32 %v358, 1e-05
        %v363 = vadd.f32 %v359, 1e-05
        %v364 = vrsqrt.pop %v360
        %v365 = vrsqrt.pop %v361
        %v366 = vrsqrt.pop %v362
        %v367 = vrsqrt.pop %v363
        %v368 = vmul.f32 %v340, %v364
        %v369 = vmul.f32 %v341, %v365
        %v370 = vmul.f32 %v342, %v366
        %v371 = vmul.f32 %v343, %v367
        %v372 = vmax.f32 %v368, 0.0
        %v373 = vmax.f32 %v369, 0.0
        %v374 = vmax.f32 %v370, 0.0
        %v375 = vmax.f32 %v371, 0.0
        %376 = vst [vmem:[%s193] sm:$0xff] %v372
        %377 = vst [vmem:[%s193 + $0x8] sm:$0xff] %v373
        %378 = vst [vmem:[%s193 + $0x10] sm:$0xff] %v374
        %379 = vst [vmem:[%s193 + $0x18] sm:$0xff] %v375
      $region36: #{_lambda_.3} parent=31 // pred_fallthru
        _
      %p380 = scmp.lt.s32.totalorder %s18, 1
      %s381 = scalar_select %p380, %s18, 1
      %s382 = smul.addr %s381, 4
      %s383 = smul.addr %s382, 8
      %s384 = scalar_lea.vmem %s3, %s383
      // Predicated region
      $region37: #{_lambda_.3} parent=31 // pred_check
        %p385 = pneg %p114
      $region38: #{_lambda_.3} parent=31 // pred_check_branch
        %387 = sbr.rel (%p385) target = $region40
      $region39: #{_lambda_.3} parent=31 // pred_region
        _
      $region40: #{_lambda_.3} parent=31 // pred_fallthru
        _
    $region32: #{_lambda_.3} parent=5 // pred_fallthru
      _
    %p388 = scmp.le.s32.totalorder 2, %s9
    // Predicated region
    $region41: #{_lambda_.3} parent=5 // pred_check
      %p389 = pneg %p388
    $region42: #{_lambda_.3} parent=5 // pred_check_branch
      %391 = sbr.rel (%p389) target = $region44
    $region43: #{_lambda_.3} parent=5 // pred_region
      %s392 = ssub.s32 %s9, 2
      // Predicated region
      $region45: #{_lambda_.3} parent=43 // pred_check
        %p393 = pneg %p120
      $region46: #{_lambda_.3} parent=43 // pred_check_branch
        %395 = sbr.rel (%p393) target = $region48
      $region47: #{_lambda_.3} parent=43 // pred_region
        %p396 = scmp.lt.s32.totalorder %s20, 1
        %s397 = scalar_select %p396, %s20, 1
        %s398 = smul.addr %s397, 4
        %s399 = smul.addr %s398, 8
        %s400 = scalar_lea.vmem %s3, %s399
      $region48: #{_lambda_.3} parent=43 // pred_fallthru
        _
    $region44: #{_lambda_.3} parent=5 // pred_fallthru
      _
  $region6: #{_lambda_.3} parent=0 // loop_footer
    %s13 = sadd.s32 1, %s9
  $region7: #{_lambda_.3} parent=0 // loop_footer_branch
    %8 = sbr.rel target = $region3
  $region8: #{_lambda_.3} parent=0 // loop_exit
    _

</llo_original>
